<compile_context>
chip_gen: v6e
topology: v6e:2x2x1
jax: 0.10.0
libtpu: 0.0.40
codegen_flags: <defaults>
</compile_context>

<pallas_src>
import functools

import jax
import jax.numpy as jnp
from jax.experimental import pallas as pl
from jax.experimental.pallas import tpu as pltpu

_LANE = 128
_MAX_LANE_WIDTH = 4096           # lane-dense width cap (multiple of 128)


def _relu6_kernel(x_ref, o_ref):
    # Pure VPU streaming: load -> max -> min -> store in the input dtype.
    x = x_ref[...]
    lo = jnp.asarray(0, dtype=x.dtype)
    hi = jnp.asarray(6, dtype=x.dtype)
    o_ref[...] = jnp.minimum(jnp.maximum(x, lo), hi)


def _sublane_multiple(dtype) -> int:
    itemsize = jnp.dtype(dtype).itemsize
    return {4: 8, 2: 16, 1: 32}.get(itemsize, 8)


def _device_kind() -> str:
    try:
        return jax.devices()[0].device_kind.lower()
    except Exception:
        return ""


def _target_block_bytes(kind: str) -> int:
    if "v7" in kind:
        return 8 << 20   # amortize per-step overhead harder on ~3.2 TB/s HBM
    return 4 << 20       # v5e / v6e: per-step overhead < ~5% at 4 MiB


@functools.lru_cache(maxsize=None)
def _build_relu6(shape: tuple, dtype_name: str, core_parallel: bool):
    dtype = jnp.dtype(dtype_name)
    itemsize = dtype.itemsize

    total = 1
    for d in shape:
        total *= d

    # Rare fallback: pad to a multiple of 128 lanes (relu6(0) == 0, harmless).
    pad = (-total) % _LANE
    padded = total + pad

    # Widest lane extent (multiple of 128, <= 4096) that evenly divides.
    width = _LANE
    while width < _MAX_LANE_WIDTH and padded % (2 * width) == 0:
        width *= 2
    rows = padded // width

    # Row tile targeting the per-generation block-byte budget, rounded to the
    # dtype sublane multiple.  Single full-extent block if everything fits.
    kind = _device_kind()
    sub = _sublane_multiple(dtype)
    target_rows = max(sub, _target_block_bytes(kind) // (width * itemsize))
    target_rows = max(sub, (target_rows // sub) * sub)
    if rows <= target_rows:
        tile_rows = rows          # block == full array extent (always legal)
    else:
        tile_rows = target_rows   # multiple of sublane tile; cdiv grid masks
                                  # the trailing partial block if any.
    grid = (pl.cdiv(rows, tile_rows),)

    # VMEM limit from the real footprint: 2 in-bufs + 2 out-bufs + slack.
    block_bytes = tile_rows * width * itemsize
    vmem_limit = min(max(4 * block_bytes + (8 << 20), 16 << 20), 48 << 20)

    if core_parallel and grid[0] >= 2:
        semantics = (pltpu.CORE_PARALLEL,)   # split rows across v7x's 2 TCs
    else:
        semantics = ("parallel",)

    call = pl.pallas_call(
        _relu6_kernel,
        out_shape=jax.ShapeDtypeStruct((rows, width), dtype),
        grid=grid,
        in_specs=[pl.BlockSpec((tile_rows, width), lambda i: (i, 0))],
        out_specs=pl.BlockSpec((tile_rows, width), lambda i: (i, 0)),
        compiler_params=pltpu.CompilerParams(
            dimension_semantics=semantics,
            vmem_limit_bytes=vmem_limit,
        ),
    )

    def _run(x):
        x_flat = x.reshape(-1)
        if pad:
            # TODO(synk): replace pad+slice tail handling with an in-kernel
            # masked last block for sizes that are not a multiple of 128.
            x_flat = jnp.pad(x_flat, (0, pad))
        y2d = call(x_flat.reshape(rows, width))
        y = y2d.reshape(-1)
        if pad:
            y = y[:total]
        return y.reshape(shape)

    return jax.jit(_run)


def relu6_pallas(x: jax.Array) -> jax.Array:
    """Applies ReLU6 elementwise to x (any shape); non-destructive."""
    kind = _device_kind()
    want_core_parallel = "v7" in kind
    dtype_name = jnp.dtype(x.dtype).name
    runner = _build_relu6(tuple(x.shape), dtype_name, want_core_parallel)
    if not want_core_parallel:
        return runner(x)
    try:
        return runner(x)
    except Exception:
        # CORE_PARALLEL rejected on this toolchain: fall back to "parallel".
        return _build_relu6(tuple(x.shape), dtype_name, False)(x)


if __name__ == "__main__":
    key = jax.random.PRNGKey(0)
    # Small NCHW input consistent with the module's elementwise forward.
    x = jax.random.normal(key, (2, 4, 16, 16), dtype=jnp.float32) * 4.0

    # Reference (kernel is non-destructive, but compute it up front anyway).
    y_ref = jnp.clip(x, 0.0, 6.0)

    y = relu6_pallas(x)
    y = jax.block_until_ready(y)

    assert y.shape == x.shape and y.dtype == x.dtype
    assert jnp.allclose(y, y_ref, atol=0.0, rtol=0.0), "mismatch vs reference"

    print("KERNEL_OK")
</pallas_src>

<mosaic_0001>
module attributes {stable_mosaic.version = 11 : i64} {
  func.func @_relu6_kernel(%arg0: i32, %arg1: memref<1x2048xf32, #tpu.memory_space<vmem>>, %arg2: memref<1x2048xf32, #tpu.memory_space<vmem>>) attributes {dimension_semantics = [#tpu.dimension_semantics<parallel>], iteration_bounds = array<i64: 1>, scalar_prefetch = 0 : i64, scratch_operands = 0 : i64, tpu.core_type = #tpu.core_type<tc>, window_params = [{transform_indices = @transform_0, window_bounds = array<i64: 1, 2048>}, {transform_indices = @transform_1, window_bounds = array<i64: 1, 2048>}]} {
    %c0 = arith.constant 0 : index
    %c0_0 = arith.constant 0 : index
    %0 = vector.load %arg1[%c0, %c0_0] : memref<1x2048xf32, #tpu.memory_space<vmem>>, vector<1x2048xf32>
    %cst = arith.constant 0.000000e+00 : f32
    %1 = vector.broadcast %cst : f32 to vector<1x2048xf32>
    %2 = arith.maximumf %0, %1 : vector<1x2048xf32>
    %cst_1 = arith.constant 6.000000e+00 : f32
    %3 = vector.broadcast %cst_1 : f32 to vector<1x2048xf32>
    %4 = arith.minimumf %2, %3 : vector<1x2048xf32>
    %c0_2 = arith.constant 0 : index
    %c0_3 = arith.constant 0 : index
    %5 = vector.load %arg2[%c0_2, %c0_3] : memref<1x2048xf32, #tpu.memory_space<vmem>>, vector<1x2048xf32>
    tpu.vector_store %arg2[%c0_2, %c0_3], %4 {strides = array<i32>} : memref<1x2048xf32, #tpu.memory_space<vmem>>, vector<1x2048xf32>,
    return
  }
  func.func @transform_0(%arg0: i32) -> (i32, i32) {
    %c0_i32 = arith.constant 0 : i32
    %c0_i32_0 = arith.constant 0 : i32
    return %arg0, %c0_i32 : i32, i32
  }
  func.func @transform_1(%arg0: i32) -> (i32, i32) {
    %c0_i32 = arith.constant 0 : i32
    %c0_i32_0 = arith.constant 0 : i32
    return %arg0, %c0_i32 : i32, i32
  }
}

</mosaic_0001>

<llo_original>
// kernel: _run.1
$region0: #{_run.1}
  #allocation0 [shape = 'u32[]', space=smem, size = 0x4, offset = 0x4, fixed_abs, tag = 'smem constant byte address 0x4 - core index']
  #allocation1 [shape = 'u32[144,128]{1,0:T(1,128)}', space=vmem, size = 0x12000, scoped, tag = 'internal scratch']
  %s0 = inlined_call_operand.vmem [shape: f32[1,2048], index: 0, kind: input, shape index: {}]
  %s1 = inlined_call_operand.vmem [shape: f32[1,2048], index: 1, kind: output, shape index: {}]
  %s2 = sld [smem:[#allocation0]]
  $region14: #{_run.1} parent=0
    _
  %s4 = ssub.s32 1, %s2
  %s5 = scalar_select 0, %s4, %s2
  // Predicated region
  $region2: #{_run.1} parent=0 // pred_check
    _
  $region3: #{_run.1} parent=0 // pred_check_branch
    %7 = sbr.rel (0) target = $region5
  $region4: #{_run.1} parent=0 // pred_region
    _
  $region5: #{_run.1} parent=0 // pred_fallthru
    _
  %v8 = vld [vmem:[%s0] sm:$0xff]
  %v9 = vld [vmem:[%s0 + $0x8] sm:$0xff]
  %v10 = vmax.f32 %v8, 0.0
  %v11 = vmax.f32 %v9, 0.0
  %v12 = vmin.f32 %v10, 6.0
  %v13 = vmin.f32 %v11, 6.0
  %14 = vst [vmem:[%s1] sm:$0xff] %v12
  %15 = vst [vmem:[%s1 + $0x8] sm:$0xff] %v13
  // Predicated region
  $region6: #{_run.1} parent=0 // pred_check
    _
  $region7: #{_run.1} parent=0 // pred_check_branch
    %17 = sbr.rel (0) target = $region9
  $region8: #{_run.1} parent=0 // pred_region
    _
  $region9: #{_run.1} parent=0 // pred_fallthru
    _
  // Predicated region
  $region10: #{_run.1} parent=0 // pred_check
    _
  $region11: #{_run.1} parent=0 // pred_check_branch
    %19 = sbr.rel (0) target = $region13
  $region12: #{_run.1} parent=0 // pred_region
    _
  $region13: #{_run.1} parent=0 // pred_fallthru
    _

</llo_original>
